<compile_context>
chip_gen: v5e
topology: v5e:2x2
jax: 0.10.0
libtpu: 0.0.40
codegen_flags: <defaults>
</compile_context>

<pallas_src>
import jax
import jax.numpy as jnp
from jax.experimental import pallas as pl
from jax.experimental.pallas import tpu as pltpu

LANE = 128                     # lane width: batch tile sizes are multiples of this
LANE_CHUNK = 1024              # in-kernel chunk along the batch/lane axis
TB_MAX = 256 * 1024            # max lanes per grid step (~32 MiB of buffers)
VMEM_LIMIT_BYTES = 48 * 1024 * 1024


def _cdiv(a, b):
    return -(-a // b)


def _round_up(n, m):
    return _cdiv(n, m) * m


def _choose_tile(b_rows, tb_max):
    """Split b_rows into n_tiles tiles of tb lanes each.

    tb is a multiple of 128 and <= tb_max; total padding waste is < 128 rows
    per tile (instead of rounding B up to a multiple of a huge tile).
    """
    b128 = _round_up(max(int(b_rows), 1), LANE)
    tb_max = max(_round_up(int(tb_max), LANE), LANE)
    n_tiles = _cdiv(b128, tb_max)
    tb = _round_up(_cdiv(b128, n_tiles), LANE)
    return tb, n_tiles


def _make_kernel(lc, n_full, rem, a_dim):
    """Build the per-tile kernel.  lc/n_full/rem/a_dim are trace-time ints."""

    def kernel(xT_ref, w0_ref, b0_ref, w1c_ref, b1_ref, oT_ref):
        # Resident parameters: loaded once per tile (hoisted out of the loop).
        w0 = w0_ref[...]                    # (H, D_in)
        b0 = b0_ref[...]                    # (H, 1)
        w1c = w1c_ref[...]                  # (H, A)
        b1 = b1_ref[...]                    # (A, 1)
        w1r = None if a_dim == 1 else w1c.T  # (A, H), only for A > 1

        def do_chunk(off, size):
            # Lane-chunked body: h (H, size) stays in vregs, never hits VMEM.
            xb = xT_ref[:, pl.ds(off, size)]                      # (D_in, size)
            h = jnp.dot(w0, xb, preferred_element_type=jnp.float32) + b0
            h = jnp.maximum(h, 0.0)                               # activation_0 = ReLU
            if a_dim == 1:
                # A == 1: VPU broadcast-multiply + cross-sublane reduce (XLU);
                # avoids an MXU push/pop for a K x 1 matmul.
                y = jnp.sum(w1c * h, axis=0, keepdims=True)       # (1, size)
            else:
                y = jnp.dot(w1r, h, preferred_element_type=jnp.float32)
            y = y + b1
            oT_ref[:, pl.ds(off, size)] = jnp.maximum(y, 0.0)     # output ReLU

        @pl.loop(0, n_full)
        def _(c):
            do_chunk(pl.multiple_of(c * lc, lc), lc)

        if rem:
            do_chunk(n_full * lc, rem)

    return kernel


def mlp_policy_forward_T(xT, w0, b0, w1, b1, *, tb_max=TB_MAX):
    """Feature-major forward (preferred entry point): xT (D_in, B) -> (A, B).

    Keeps the batch on the 128-lane axis with no wrapper-side transpose; B is
    padded internally to a multiple of 128 lanes (waste < 128 rows per tile).
    """
    xT = jnp.asarray(xT, jnp.float32)
    D_in, B = xT.shape
    H = w0.shape[0]
    A = w1.shape[0]

    tb, n_tiles = _choose_tile(B, tb_max)
    B_pad = tb * n_tiles
    if B_pad != B:
        xT = jnp.pad(xT, ((0, 0), (0, B_pad - B)))

    # Parameter layout plumbing (tiny, wrapper-side XLA ops).
    w0f = jnp.asarray(w0, jnp.float32).reshape(H, D_in)   # torch layout
    b0c = jnp.asarray(b0, jnp.float32).reshape(H, 1)
    w1c = jnp.asarray(w1, jnp.float32).reshape(A, H).T    # (H, A) column layout
    b1c = jnp.asarray(b1, jnp.float32).reshape(A, 1)

    lc = min(LANE_CHUNK, tb)
    n_full = tb // lc
    rem = tb - n_full * lc
    kernel = _make_kernel(lc, n_full, rem, A)

    yT = pl.pallas_call(
        kernel,
        out_shape=jax.ShapeDtypeStruct((A, B_pad), jnp.float32),
        grid=(n_tiles,),
        in_specs=[
            # Streaming x tiles: default double-buffering (compute per tile is
            # trivial; a third buffer would only burn VMEM).
            pl.BlockSpec((D_in, tb), lambda i: (0, i)),
            # Parameters: resident across the whole grid.
            pl.BlockSpec((H, D_in), lambda i: (0, 0)),
            pl.BlockSpec((H, 1),    lambda i: (0, 0)),
            pl.BlockSpec((H, A),    lambda i: (0, 0)),
            pl.BlockSpec((A, 1),    lambda i: (0, 0)),
        ],
        out_specs=pl.BlockSpec((A, tb), lambda i: (0, i)),
        compiler_params=pltpu.CompilerParams(
            # TODO(synk): on v7x, if profiling shows one TensorCore idle,
            # switch to (pltpu.CORE_PARALLEL,) to shard batch tiles across TCs.
            dimension_semantics=("parallel",),
            vmem_limit_bytes=VMEM_LIMIT_BYTES,
        ),
    )(xT, w0f, b0c, w1c, b1c)

    return yT[:, :B]


def mlp_policy_forward(x, w0, b0, w1, b1, *, tb_max=TB_MAX):
    """Batch-major forward matching the torch module: x (B, D_in) -> (B, A)."""
    x = jnp.asarray(x, jnp.float32)
    if x.ndim == 1:                      # torch forward unsqueezes 1-D inputs
        x = x[None, :]
    B = x.shape[0]

    tb, n_tiles = _choose_tile(B, tb_max)
    B_pad = tb * n_tiles
    # Single fusible pad -> transpose (one XLA copy). Prefer calling
    # mlp_policy_forward_T with feature-major activations to avoid it.
    xT = jnp.pad(x, ((0, B_pad - B), (0, 0))).T
    yT = mlp_policy_forward_T(xT, w0, b0, w1, b1, tb_max=tb_max)
    return yT[:, :B].T                   # (B, A)


def init_params(key, input_dim, hid_dim, action_dim):
    """Mimic torch.nn.Linear init: U(-1/sqrt(fan_in), 1/sqrt(fan_in)), torch layout."""
    k0, k1, k2, k3 = jax.random.split(key, 4)
    bound0 = 1.0 / jnp.sqrt(jnp.float32(input_dim))
    bound1 = 1.0 / jnp.sqrt(jnp.float32(hid_dim))
    w0 = jax.random.uniform(k0, (hid_dim, input_dim), jnp.float32, -bound0, bound0)
    b0 = jax.random.uniform(k1, (hid_dim,), jnp.float32, -bound0, bound0)
    w1 = jax.random.uniform(k2, (action_dim, hid_dim), jnp.float32, -bound1, bound1)
    b1 = jax.random.uniform(k3, (action_dim,), jnp.float32, -bound1, bound1)
    return w0, b0, w1, b1


def _reference(x, w0, b0, w1, b1):
    """Pure-JAX reference of the same semantics (torch-layout weights)."""
    h = jnp.maximum(x @ w0.T + b0, 0.0)
    return jnp.maximum(h @ w1.T + b1, 0.0)


if __name__ == "__main__":
    # Module defaults: dim_x=5, dim_h=16, dim_y=1, non-discrete.
    input_dim, hid_dim, action_dim = 5, 16, 1

    key = jax.random.PRNGKey(0)
    kp, kx1, kx2, kx3 = jax.random.split(key, 4)
    w0, b0, w1, b1 = init_params(kp, input_dim, hid_dim, action_dim)

    # 1) Module-default small batch: single tile, single lane chunk.
    x1 = jax.random.normal(kx1, (2, input_dim), dtype=jnp.float32)
    o1 = jax.block_until_ready(mlp_policy_forward(x1, w0, b0, w1, b1))
    r1 = _reference(x1, w0, b0, w1, b1)
    assert o1.shape == (2, action_dim)
    assert jnp.allclose(o1, r1, atol=1e-5, rtol=1e-5)

    # 2) Batch that exercises the ragged (remainder) lane-chunk path
    #    (tb=1280 -> one 1024-lane chunk + one 256-lane remainder).
    x2 = jax.random.normal(kx2, (1200, input_dim), dtype=jnp.float32)
    o2 = jax.block_until_ready(mlp_policy_forward(x2, w0, b0, w1, b1))
    r2 = _reference(x2, w0, b0, w1, b1)
    assert o2.shape == (1200, action_dim)
    assert jnp.allclose(o2, r2, atol=1e-5, rtol=1e-5)

    # 3) Small tb_max to exercise the multi-tile batch grid + padding path.
    x3 = jax.random.normal(kx3, (1000, input_dim), dtype=jnp.float32)
    o3 = jax.block_until_ready(mlp_policy_forward(x3, w0, b0, w1, b1, tb_max=512))
    r3 = _reference(x3, w0, b0, w1, b1)
    assert o3.shape == (1000, action_dim)
    assert jnp.allclose(o3, r3, atol=1e-5, rtol=1e-5)

    print("KERNEL_OK")
</pallas_src>

<mosaic_0001>
module attributes {stable_mosaic.version = 11 : i64} {
  func.func @kernel(%arg0: i32, %arg1: memref<5x128xf32, #tpu.memory_space<vmem>>, %arg2: memref<16x5xf32, #tpu.memory_space<vmem>>, %arg3: memref<16x1xf32, #tpu.memory_space<vmem>>, %arg4: memref<16x1xf32, #tpu.memory_space<vmem>>, %arg5: memref<1x1xf32, #tpu.memory_space<vmem>>, %arg6: memref<1x128xf32, #tpu.memory_space<vmem>>) attributes {dimension_semantics = [#tpu.dimension_semantics<parallel>], iteration_bounds = array<i64: 1>, scalar_prefetch = 0 : i64, scratch_operands = 0 : i64, tpu.core_type = #tpu.core_type<tc>, window_params = [{transform_indices = @transform_0, window_bounds = array<i64: 5, 128>}, {pipeline_mode = #tpu.pipeline_mode<synchronous>, transform_indices = @transform_1, window_bounds = array<i64: 16, 5>}, {pipeline_mode = #tpu.pipeline_mode<synchronous>, transform_indices = @transform_2, window_bounds = array<i64: 16, 1>}, {pipeline_mode = #tpu.pipeline_mode<synchronous>, transform_indices = @transform_3, window_bounds = array<i64: 16, 1>}, {pipeline_mode = #tpu.pipeline_mode<synchronous>, transform_indices = @transform_4, window_bounds = array<i64: 1, 1>}, {transform_indices = @transform_5, window_bounds = array<i64: 1, 128>}]} {
    %c0 = arith.constant 0 : index
    %c0_0 = arith.constant 0 : index
    %0 = vector.load %arg2[%c0, %c0_0] : memref<16x5xf32, #tpu.memory_space<vmem>>, vector<16x5xf32>
    %c0_1 = arith.constant 0 : index
    %c0_2 = arith.constant 0 : index
    %1 = vector.load %arg3[%c0_1, %c0_2] : memref<16x1xf32, #tpu.memory_space<vmem>>, vector<16x1xf32>
    %c0_3 = arith.constant 0 : index
    %c0_4 = arith.constant 0 : index
    %2 = vector.load %arg4[%c0_3, %c0_4] : memref<16x1xf32, #tpu.memory_space<vmem>>, vector<16x1xf32>
    %c0_5 = arith.constant 0 : index
    %c0_6 = arith.constant 0 : index
    %3 = vector.load %arg5[%c0_5, %c0_6] : memref<1x1xf32, #tpu.memory_space<vmem>>, vector<1x1xf32>
    %c0_i32 = arith.constant 0 : i32
    %c1_i32 = arith.constant 1 : i32
    %4 = arith.muli %c0_i32, %c1_i32 : i32
    %c0_i32_7 = arith.constant 0 : i32
    %5 = arith.addi %c0_i32_7, %4 : i32
    %c128_i32 = arith.constant 128 : i32
    %6 = arith.muli %5, %c128_i32 : i32
    %7 = tpu.assume_multiple %6, 128 : i32
    %c0_8 = arith.constant 0 : index
    %8 = arith.index_cast %7 : i32 to index
    %9 = vector.load %arg1[%c0_8, %8] : memref<5x128xf32, #tpu.memory_space<vmem>>, vector<5x128xf32>
    %cst = arith.constant dense<0.000000e+00> : vector<16x128xf32>
    %10 = tpu.matmul %0, %9, %cst {dimension_numbers = #tpu.dot_dimension_numbers<[1], [0], [0], [1], [0, 0, 1, 1], [], []>} : vector<16x5xf32>, vector<5x128xf32>, vector<16x128xf32> -> vector<16x128xf32>
    %11 = vector.broadcast %1 : vector<16x1xf32> to vector<16x128xf32>
    %12 = arith.addf %10, %11 : vector<16x128xf32>
    %cst_9 = arith.constant 0.000000e+00 : f32
    %13 = vector.broadcast %cst_9 : f32 to vector<16x128xf32>
    %14 = arith.maximumf %12, %13 : vector<16x128xf32>
    %15 = vector.broadcast %2 : vector<16x1xf32> to vector<16x128xf32>
    %16 = arith.mulf %15, %14 : vector<16x128xf32>
    %cst_10 = arith.constant dense<0.000000e+00> : vector<128xf32>
    %17 = vector.multi_reduction <add>, %16, %cst_10 [0] : vector<16x128xf32> to vector<128xf32>
    %18 = vector.shape_cast %17 : vector<128xf32> to vector<1x128xf32>
    %19 = vector.broadcast %3 : vector<1x1xf32> to vector<1x128xf32>
    %20 = arith.addf %18, %19 : vector<1x128xf32>
    %cst_11 = arith.constant 0.000000e+00 : f32
    %21 = vector.broadcast %cst_11 : f32 to vector<1x128xf32>
    %22 = arith.maximumf %20, %21 : vector<1x128xf32>
    %c0_12 = arith.constant 0 : index
    %23 = arith.index_cast %7 : i32 to index
    %24 = vector.load %arg6[%c0_12, %23] : memref<1x128xf32, #tpu.memory_space<vmem>>, vector<1x128xf32>
    tpu.vector_store %arg6[%c0_12, %23], %22 {strides = array<i32>} : memref<1x128xf32, #tpu.memory_space<vmem>>, vector<1x128xf32>,
    %c1_i32_13 = arith.constant 1 : i32
    return
  }
  func.func @transform_0(%arg0: i32) -> (i32, i32) {
    %c0_i32 = arith.constant 0 : i32
    %c0_i32_0 = arith.constant 0 : i32
    return %c0_i32, %arg0 : i32, i32
  }
  func.func @transform_1(%arg0: i32) -> (i32, i32) {
    %c0_i32 = arith.constant 0 : i32
    %c0_i32_0 = arith.constant 0 : i32
    %c0_i32_1 = arith.constant 0 : i32
    return %c0_i32, %c0_i32_0 : i32, i32
  }
  func.func @transform_2(%arg0: i32) -> (i32, i32) {
    %c0_i32 = arith.constant 0 : i32
    %c0_i32_0 = arith.constant 0 : i32
    %c0_i32_1 = arith.constant 0 : i32
    return %c0_i32, %c0_i32_0 : i32, i32
  }
  func.func @transform_3(%arg0: i32) -> (i32, i32) {
    %c0_i32 = arith.constant 0 : i32
    %c0_i32_0 = arith.constant 0 : i32
    %c0_i32_1 = arith.constant 0 : i32
    return %c0_i32, %c0_i32_0 : i32, i32
  }
  func.func @transform_4(%arg0: i32) -> (i32, i32) {
    %c0_i32 = arith.constant 0 : i32
    %c0_i32_0 = arith.constant 0 : i32
    %c0_i32_1 = arith.constant 0 : i32
    return %c0_i32, %c0_i32_0 : i32, i32
  }
  func.func @transform_5(%arg0: i32) -> (i32, i32) {
    %c0_i32 = arith.constant 0 : i32
    %c0_i32_0 = arith.constant 0 : i32
    return %c0_i32, %arg0 : i32, i32
  }
}

</mosaic_0001>

<llo_original>
// kernel: tpu_custom_call.1
$region0: #{tpu_custom_call.1}
  #allocation0 [shape = 'u32[]', space=smem, size = 0x4, offset = 0x4, fixed_abs, tag = 'smem constant byte address 0x4 - core index']
  #allocation1 [shape = 'u32[72,128]{1,0:T(1,128)}', space=vmem, size = 0x9000, scoped, tag = 'internal scratch']
  #allocation2 [shape = 'f32[1,1]{1,0:T(1,128)S(1)}', space=vmem, size = 0x200, scoped, tag = 'scoped memory for tpu_custom_call.1']
  %s0 = inlined_call_operand.vmem [shape: f32[5,128], index: 0, kind: input, shape index: {}]
  %s1 = inlined_call_operand.vmem [shape: f32[16,5], index: 1, kind: input, shape index: {}]
  %s2 = inlined_call_operand.vmem [shape: f32[16,1], index: 2, kind: input, shape index: {}]
  %s3 = inlined_call_operand.vmem [shape: f32[16,1], index: 3, kind: input, shape index: {}]
  %s4 = inlined_call_operand.<no memory space> [shape: f32[1,1], index: 4, kind: input, shape index: {}]
  %s5 = inlined_call_operand.hbm [shape: f32[1,128], index: 5, kind: output, shape index: {}]
  %s6 = sld [smem:[#allocation0]]
  $region30: #{tpu_custom_call.1} parent=0
    _
  %s8 = ssub.s32 1, %s6
  %s9 = scalar_select 0, %s8, %s6
  %v10 = vstv %s4
  %11 = vst [vmem:[#allocation2] sm:$0x1] %v10
  $region1: #{tpu_custom_call.1} parent=0
    #allocation3 [shape = 'u8[512]{0}', space=vmem, size = 0x400, scoped, tag = 'output window, operand 0, single buffered']
    #allocation4 [shape = 's32[1]{0}', space=sflag, size = 0x4, scoped, tag = 'scoped memory for tpu_custom_call.1']
    %12 = vsyncpa [#allocation4], 0
    // Predicated region
    $region2: #{tpu_custom_call.1} parent=1 // pred_check
      _
    $region3: #{tpu_custom_call.1} parent=1 // pred_check_branch
      %14 = sbr.rel (0) target = $region5
    $region4: #{tpu_custom_call.1} parent=1 // pred_region
      _
    $region5: #{tpu_custom_call.1} parent=1 // pred_fallthru
      _
    // Predicated region
    $region6: #{tpu_custom_call.1} parent=1 // pred_check
      _
    $region7: #{tpu_custom_call.1} parent=1 // pred_check_branch
      %16 = sbr.rel (0) target = $region9
    $region8: #{tpu_custom_call.1} parent=1 // pred_region
      _
    $region9: #{tpu_custom_call.1} parent=1 // pred_fallthru
      _
    // Predicated region
    $region10: #{tpu_custom_call.1} parent=1 // pred_check
      _
    $region11: #{tpu_custom_call.1} parent=1 // pred_check_branch
      %18 = sbr.rel (0) target = $region13
    $region12: #{tpu_custom_call.1} parent=1 // pred_region
      _
    $region13: #{tpu_custom_call.1} parent=1 // pred_fallthru
      _
    // Predicated region
    $region14: #{tpu_custom_call.1} parent=1 // pred_check
      _
    $region15: #{tpu_custom_call.1} parent=1 // pred_check_branch
      %20 = sbr.rel (0) target = $region17
    $region16: #{tpu_custom_call.1} parent=1 // pred_region
      _
    $region17: #{tpu_custom_call.1} parent=1 // pred_fallthru
      _
    // Predicated region
    $region18: #{tpu_custom_call.1} parent=1 // pred_check
      _
    $region19: #{tpu_custom_call.1} parent=1 // pred_check_branch
      %22 = sbr.rel (0) target = $region21
    $region20: #{tpu_custom_call.1} parent=1 // pred_region
      _
    $region21: #{tpu_custom_call.1} parent=1 // pred_fallthru
      _
    %v23 = vld [vmem:[%s1] sm:$0xff]
    %v24 = vld [vmem:[%s1 + $0x8] sm:$0xff]
    %v25 = vld [vmem:[%s2] sm:$0xff]
    %v26 = vld [vmem:[%s2 + $0x8] sm:$0xff]
    %v27 = vld [vmem:[%s3] sm:$0xff]
    %v28 = vld [vmem:[%s3 + $0x8] sm:$0xff]
    %v29 = vld [vmem:[#allocation2] sm:$0x1]
    %v30 = vld [vmem:[%s0] sm:$0x1f]
    %32 = vset.pattern.permute.xlu0 0
    %33 = vperm.xlu0 %32, %v25
    %v34 = vpop.permute.xlu0 %33
    %37 = vset.pattern.permute.xlu0 0
    %38 = vperm.xlu0 %37, %v26
    %v39 = vpop.permute.xlu0 %38
    %vm41 = vcmask 39936
    %v43 = vsel %vm41, %v23, 0
    %v46 = vsel %vm41, %v24, 0
    %vm48 = vcmask 1044480
    %v50 = vsel %vm48, %v30, 0
    %52 = vmatpush.msra.mxu0 0.0
    %53 = vmatpush.msra.mxu0 0.0
    %54 = vmatpush.msra.mxu0 0.0
    %55 = vmatpush.msra.mxu0 0.0
    %56 = vmatpush.msra.mxu0 0.0
    %57 = vmatpush.msra.mxu0 0.0
    %58 = vmatpush.msra.mxu0 0.0
    %59 = vmatpush.msra.mxu0 0.0
    %60 = vmatpush.msra.mxu0 0.0
    %61 = vmatpush.msra.mxu0 0.0
    %62 = vmatpush.msra.mxu0 0.0
    %63 = vmatpush.msra.mxu0 0.0
    %64 = vmatpush.msra.mxu0 0.0
    %65 = vmatpush.msra.mxu0 0.0
    %66 = vmatpush.msra.mxu0 0.0
    %67 = vmatpush.msra.mxu0 %v50
    %68 = vmatmul.f32.gmra.mxu0 %v43
    %v69 = vpop.f32.mrf.mxu0
    %v70 = vadd.f32 %v34, %v69
    %71 = vmatmul.f32.gmra.mxu0 %v46
    %v72 = vpop.f32.mrf.mxu0
    %v73 = vadd.f32 %v39, %v72
    %74 = vdwg.mxu0
    %v75 = vmax.f32 %v70, 0.0
    %v76 = vmax.f32 %v73, 0.0
    %78 = vset.pattern.permute.xlu0 0
    %79 = vperm.xlu0 %78, %v27
    %v80 = vpop.permute.xlu0 %79
    %83 = vset.pattern.permute.xlu0 0
    %84 = vperm.xlu0 %83, %v28
    %v85 = vpop.permute.xlu0 %84
    %v87 = vmul.f32 %v80, %v75
    %v88 = vmul.f32 %v85, %v76
    %v89 = vadd.f32 %v87, %v88
    %v90 = vrot.slane %v89, 4
    %v91 = vadd.f32 %v89, %v90
    %v92 = vrot.slane %v91, 2
    %v93 = vadd.f32 %v91, %v92
    %v94 = vrot.slane %v93, 1
    %v95 = vadd.f32 %v93, %v94
    %97 = vset.pattern.permute.xlu0 0
    %98 = vperm.xlu0 %97, %v29
    %v99 = vpop.permute.xlu0 %98
    %v101 = vperm.slane %v99, 0
    %v102 = vadd.f32 %v95, %v101
    %v103 = vmax.f32 %v102, 0.0
    %104 = vst [vmem:[#allocation3] sm:$0x1] %v103
    // Predicated region
    $region22: #{tpu_custom_call.1} parent=1 // pred_check
      _
    $region23: #{tpu_custom_call.1} parent=1 // pred_check_branch
      %106 = sbr.rel (0) target = $region25
    $region24: #{tpu_custom_call.1} parent=1 // pred_region
      %108 = vsyncadd [#allocation4], 0
      %s110 = sshll.u32 [#allocation3], 4
      %s111 = int_to_ptr.vmem [resolvable:$true] %s110
      %s112 = sshll.u32 %s5, 4
      %s113 = int_to_ptr.hbm [resolvable:$true] %s112
      %115 = dma.vmem_to_hbm [thread:$0]  %s111, 16, %s113, [#allocation4]
    $region25: #{tpu_custom_call.1} parent=1 // pred_fallthru
      _
    // Predicated region
    $region26: #{tpu_custom_call.1} parent=1 // pred_check
      _
    $region27: #{tpu_custom_call.1} parent=1 // pred_check_branch
      %117 = sbr.rel (0) target = $region29
    $region28: #{tpu_custom_call.1} parent=1 // pred_region
      %119 = dma.done [#allocation4], 16
    $region29: #{tpu_custom_call.1} parent=1 // pred_fallthru
      _
    %120 = vsyncpa [#allocation4], 1

</llo_original>
